<compile_context>
chip_gen: v5e
topology: v5e:2x2
jax: 0.10.0
libtpu: 0.0.40
codegen_flags: <defaults>
</compile_context>

<pallas_src>
import math

import jax
import jax.numpy as jnp
from jax import lax
from jax.experimental import pallas as pl
from jax.experimental.pallas import tpu as pltpu


def get_qrange(signed: bool, n_bits: int):
    """Mirror of dlmc get_qrange: symmetric signed range / unsigned range."""
    if signed:
        return -(2 ** (n_bits - 1)), 2 ** (n_bits - 1) - 1
    return 0, 2 ** n_bits - 1


def _cdiv(a: int, b: int) -> int:
    return -(-a // b)


def _round_up(a: int, b: int) -> int:
    return _cdiv(a, b) * b


def _pick_tile(dim: int, tile_max: int, align: int):
    """Aligned tile <= tile_max that keeps zero-padding of `dim` bounded."""
    dim_p = _round_up(dim, align)
    n_blocks = _cdiv(dim_p, min(tile_max, dim_p))
    tile = _round_up(_cdiv(dim_p, n_blocks), align)
    return tile, _round_up(dim_p, tile)


def _chip_generation() -> str:
    try:
        kind = jax.devices()[0].device_kind.lower().replace(" ", "")
    except Exception:
        return "unknown"
    if "v5lite" in kind or "v5e" in kind:
        return "v5e"
    if "v5p" in kind or kind.endswith("v5"):
        return "v5p"
    if "v6" in kind:
        return "v6e"
    if "v7" in kind or "7x" in kind:
        return "v7x"
    return "unknown"


_VMEM_CAPS = {"v5e": 100 << 20, "v5p": 100 << 20, "v6e": 100 << 20, "v7x": 48 << 20}


def _vmem_cap(gen: str) -> int:
    return _VMEM_CAPS.get(gen, 48 << 20)


# --------------------------------------------------------------------------------------
# Per-operand fake-quantization + padding kernel (hoisted out of the matmul hot loop).
# --------------------------------------------------------------------------------------
def _make_prequant_kernel(qmin, qmax, enable, integer_grid, src_rows, src_cols,
                          mask_rows, mask_cols):
    def kernel(s_ref, t_ref, o_ref):
        # s_ref: f32[2] = [1/scale, scale] (scalar prefetch, lives in SMEM).
        tr, tc = o_ref.shape
        x = t_ref[...]
        # Edge blocks read unspecified data beyond the source extent; zero it so the
        # padded region quantizes to 0 (offset == 0 in the LSQ path -> neutral).
        if mask_rows or mask_cols:
            valid = None
            if mask_rows:
                row = (pl.program_id(0) * tr
                       + lax.broadcasted_iota(jnp.int32, (tr, tc), 0))
                valid = row < src_rows
            if mask_cols:
                col = (pl.program_id(1) * tc
                       + lax.broadcasted_iota(jnp.int32, (tr, tc), 1))
                cmask = col < src_cols
                valid = cmask if valid is None else jnp.logical_and(valid, cmask)
            x = jnp.where(valid, x, 0.0)
        if enable:
            # Per-element divide replaced by the hoisted scalar reciprocal s_ref[0].
            q = jnp.round(jnp.clip(x * s_ref[0], float(qmin), float(qmax)))
            if integer_grid:
                # Raw quantization codes; combined scale applied post-accumulation.
                o_ref[...] = q.astype(o_ref.dtype)
            else:
                o_ref[...] = (q * s_ref[1]).astype(o_ref.dtype)
        else:
            o_ref[...] = x.astype(o_ref.dtype)

    return kernel


def _fake_quant_pad(t, scale, qmin, qmax, enable, integer_grid, out_dtype, out_bytes,
                    rows_p, cols_p, tr, tc, gen):
    """Fake-quantize (optionally) and zero-pad `t` to (rows_p, cols_p) in one pass."""
    R, C = t.shape
    needs_pad = (rows_p != R) or (cols_p != C)
    if not enable and not needs_pad:
        return t

    scales = jnp.stack([1.0 / scale, scale]).astype(jnp.float32)
    vmem_need = 2 * tr * tc * (4 + out_bytes)          # double-buffered in + out
    vmem_limit = int(min(max(int(1.5 * vmem_need), 8 << 20), _vmem_cap(gen)))
    kernel = _make_prequant_kernel(qmin, qmax, enable, integer_grid, R, C,
                                   rows_p != R, cols_p != C)
    return pl.pallas_call(
        kernel,
        out_shape=jax.ShapeDtypeStruct((rows_p, cols_p), out_dtype),
        grid_spec=pltpu.PrefetchScalarGridSpec(
            num_scalar_prefetch=1,
            grid=(rows_p // tr, cols_p // tc),
            in_specs=[pl.BlockSpec((tr, tc), lambda i, j, s: (i, j))],
            out_specs=pl.BlockSpec((tr, tc), lambda i, j, s: (i, j)),
        ),
        compiler_params=pltpu.CompilerParams(
            dimension_semantics=("parallel", "parallel"),
            vmem_limit_bytes=vmem_limit),
    )(scales, t)


# --------------------------------------------------------------------------------------
# Matmul kernel (y = x_q @ W_q^T): pure MXU + accumulate, scale applied at writeback.
# --------------------------------------------------------------------------------------
def _make_qmatmul_kernel(acc_dtype):
    def kernel(s_ref, x_ref, w_ref, o_ref, acc_ref):
        # s_ref: f32[1] = [writeback multiplier] (in_s*wt_s on the integer path, else 1).
        k = pl.program_id(2)

        @pl.when(k == 0)
        def _():
            acc_ref[...] = jnp.zeros_like(acc_ref)

        # NT-form contraction against the (N, K) weight layout -- no in-kernel transpose.
        acc_ref[...] += lax.dot_general(
            x_ref[...], w_ref[...],
            dimension_numbers=(((1,), (1,)), ((), ())),
            preferred_element_type=acc_dtype)

        @pl.when(k == pl.num_programs(2) - 1)
        def _():
            o_ref[...] = (acc_ref[...].astype(jnp.float32) * s_ref[0]).astype(o_ref.dtype)

    return kernel


# --------------------------------------------------------------------------------------
# Wrapper: QBase.forward with a Linear _forward_func.
# --------------------------------------------------------------------------------------
def qbase_linear_forward(x, weight, qconfig, in_scale=None, wt_scale=None,
                         *, tm_max=512, tn_max=512, tk_max=2048):
    """x: (B, in_features) f32; weight: (out_features, in_features) f32 (nn.Linear layout).

    in_scale / wt_scale: optional learned per-tensor scales.  If None, the LSQ
    first-call initialization (2*mean|t|/sqrt(qmax)) is used, matching the
    init_state == 0 branch of QBase.forward.
    """
    in_enable = qconfig['input']['enable']
    wt_enable = qconfig['weight']['enable']
    in_min, in_max = get_qrange(qconfig['input']['args']['signed'],
                                qconfig['input']['args']['n_bits'])
    wt_min, wt_max = get_qrange(qconfig['weight']['args']['signed'],
                                qconfig['weight']['args']['n_bits'])

    x = x.astype(jnp.float32)
    weight = weight.astype(jnp.float32)
    M, K = x.shape
    N, K2 = weight.shape
    assert K == K2

    # --- per-tensor scales (LSQ first-call init if not provided) ---
    # grad_scale / round_pass are straight-through estimators: identity in the forward.
    # TODO(synk): QBase keeps init_state buffers and learned nn.Parameter scales; after
    # the first step pass the learned scales via in_scale/wt_scale instead of re-deriving.
    eps = jnp.float32(1e-12)
    if in_enable:
        in_s = (jnp.asarray(in_scale, jnp.float32) if in_scale is not None
                else 2.0 * jnp.mean(jnp.abs(x)) / math.sqrt(in_max))
        in_s = jnp.maximum(in_s, eps)          # guard: all-zero input / collapsed scale
    else:
        in_s = jnp.float32(1.0)
    if wt_enable:
        wt_s = (jnp.asarray(wt_scale, jnp.float32) if wt_scale is not None
                else 2.0 * jnp.mean(jnp.abs(weight)) / math.sqrt(wt_max))
        wt_s = jnp.maximum(wt_s, eps)
    else:
        wt_s = jnp.float32(1.0)
    # Offsets are identically zero in the LSQ path; kernels are specialized on that.

    # --- MXU operand dtype ---
    # Integer-grid path is exact when both sides are quantized with zero offset:
    # (x_i*s_x) @ (w_i*s_w)^T == (s_x*s_w) * (x_i @ w_i^T).
    gen = _chip_generation()
    integer_path = bool(in_enable and wt_enable)
    int8_ok = (integer_path
               and in_min >= -128 and in_max <= 127
               and wt_min >= -128 and wt_max <= 127
               and gen in ("v5e", "v5p", "v6e"))      # v7x has no integer MXU
    # TODO(synk): unsigned 8-bit codes (0..255) don't fit int8; a zero-point shift plus a
    # per-column correction term would enable int8 there too — kept on bf16 for now.
    if integer_path:
        if int8_ok:
            op_dtype, op_bytes, acc_dtype, sub = jnp.int8, 1, jnp.int32, 32
        else:
            op_dtype, op_bytes, acc_dtype, sub = jnp.bfloat16, 2, jnp.float32, 16
    else:
        op_dtype, op_bytes, acc_dtype, sub = jnp.float32, 4, jnp.float32, 8

    # --- padding-aware tile selection (lane-dense, dtype-aligned sublanes) ---
    tm, Mp = _pick_tile(M, tm_max, sub)
    tn, Np = _pick_tile(N, tn_max, 128)
    tk, Kp = _pick_tile(K, tk_max, 128)

    # v7x has 2 TensorCores: keep >= 2 programs on the parallel axes when possible.
    if gen == "v7x" and (Mp // tm) * (Np // tn) < 2:
        if Np // 128 >= 2:
            tn, Np = _pick_tile(N, max(128, tn // 2), 128)
        elif Mp // sub >= 2:
            tm, Mp = _pick_tile(M, max(sub, tm // 2), sub)

    # --- hoisted fake-quant (+ padding) for both operands, once each ---
    x_q = _fake_quant_pad(x, in_s, in_min, in_max, in_enable, integer_path,
                          op_dtype, op_bytes, Mp, Kp, tm, tk, gen)
    w_q = _fake_quant_pad(weight, wt_s, wt_min, wt_max, wt_enable, integer_path,
                          op_dtype, op_bytes, Np, Kp, tn, tk, gen)

    post_mul = (in_s * wt_s) if integer_path else jnp.float32(1.0)
    scales = jnp.reshape(post_mul, (1,)).astype(jnp.float32)

    grid = (Mp // tm, Np // tn, Kp // tk)
    vmem_need = (2 * (tm * tk + tn * tk) * op_bytes   # double-buffered x / W tiles
                 + 2 * tm * tn * 4                    # double-buffered f32 output tile
                 + tm * tn * 4)                       # accumulator scratch
    vmem_limit = int(min(max(int(1.5 * vmem_need), 8 << 20), _vmem_cap(gen)))

    out_p = pl.pallas_call(
        _make_qmatmul_kernel(acc_dtype),
        out_shape=jax.ShapeDtypeStruct((Mp, Np), jnp.float32),
        grid_spec=pltpu.PrefetchScalarGridSpec(
            num_scalar_prefetch=1,
            grid=grid,
            in_specs=[
                pl.BlockSpec((tm, tk), lambda i, j, k, s: (i, k)),   # x_q tile
                pl.BlockSpec((tn, tk), lambda i, j, k, s: (j, k)),   # W_q tile (N, K)
            ],
            out_specs=pl.BlockSpec((tm, tn), lambda i, j, k, s: (i, j)),
            scratch_shapes=[pltpu.VMEM((tm, tn), acc_dtype)],
        ),
        compiler_params=pltpu.CompilerParams(
            dimension_semantics=("parallel", "parallel", "arbitrary"),
            vmem_limit_bytes=vmem_limit),
    )(scales, x_q, w_q)

    return out_p[:M, :N]


# --------------------------------------------------------------------------------------
# Pure-JAX reference mirroring the PyTorch forward semantics.
# --------------------------------------------------------------------------------------
def qbase_linear_reference(x, weight, qconfig, in_scale=None, wt_scale=None):
    in_min, in_max = get_qrange(qconfig['input']['args']['signed'],
                                qconfig['input']['args']['n_bits'])
    wt_min, wt_max = get_qrange(qconfig['weight']['args']['signed'],
                                qconfig['weight']['args']['n_bits'])
    xq, wq = x, weight
    if qconfig['input']['enable']:
        s = (jnp.asarray(in_scale, jnp.float32) if in_scale is not None
             else 2.0 * jnp.mean(jnp.abs(x)) / math.sqrt(in_max))
        xq = jnp.round(jnp.clip(x * (1.0 / s), in_min, in_max)) * s
    if qconfig['weight']['enable']:
        s = (jnp.asarray(wt_scale, jnp.float32) if wt_scale is not None
             else 2.0 * jnp.mean(jnp.abs(weight)) / math.sqrt(wt_max))
        wq = jnp.round(jnp.clip(weight * (1.0 / s), wt_min, wt_max)) * s
    return xq @ wq.T


if __name__ == "__main__":
    # qconfig consistent with QBase.initialize (per-tensor LSQ on input & weight).
    qcfg_u8 = {
        'input':  {'enable': True, 'type': 'LSQ',
                   'args': {'signed': False, 'n_bits': 8}},
        'weight': {'enable': True, 'type': 'LSQ',
                   'args': {'signed': True, 'n_bits': 8}},
    }
    qcfg_s8 = {
        'input':  {'enable': True, 'type': 'LSQ',
                   'args': {'signed': True, 'n_bits': 8}},
        'weight': {'enable': True, 'type': 'LSQ',
                   'args': {'signed': True, 'n_bits': 8}},
    }
    qcfg_wt_only = {
        'input':  {'enable': False, 'type': 'LSQ',
                   'args': {'signed': False, 'n_bits': 8}},
        'weight': {'enable': True, 'type': 'LSQ',
                   'args': {'signed': True, 'n_bits': 8}},
    }

    B, IN_F, OUT_F = 8, 32, 32  # small shapes: batch=8, hidden=32
    key = jax.random.PRNGKey(0)
    kx, kw = jax.random.split(key)
    x = jax.random.normal(kx, (B, IN_F), dtype=jnp.float32)
    weight = 0.1 * jax.random.normal(kw, (OUT_F, IN_F), dtype=jnp.float32)

    def check(name, out, ref):
        out = jax.block_until_ready(out)
        err = float(jnp.max(jnp.abs(out - ref)))
        assert out.shape == ref.shape, f"{name}: shape {out.shape} vs {ref.shape}"
        assert jnp.allclose(out, ref, atol=1e-3, rtol=1e-3), \
            f"{name}: mismatch, max err {err}"

    # 1) LSQ first-call initialization path (unsigned activation -> bf16 integer grid).
    check("init-path",
          qbase_linear_forward(x, weight, qcfg_u8),
          qbase_linear_reference(x, weight, qcfg_u8))

    # 2) "learned scale" path (explicit per-tensor scales, as after training steps).
    check("learned-scale",
          qbase_linear_forward(x, weight, qcfg_u8, in_scale=0.05, wt_scale=0.01),
          qbase_linear_reference(x, weight, qcfg_u8, in_scale=0.05, wt_scale=0.01))

    # 3) signed/signed config: exercises the int8/int32 MXU path on v5e/v6e (bf16 on v7x).
    check("signed-int-grid",
          qbase_linear_forward(x, weight, qcfg_s8),
          qbase_linear_reference(x, weight, qcfg_s8))

    # 4) weight-only quantization: f32 path with padding folded into the prequant pass.
    check("weight-only",
          qbase_linear_forward(x, weight, qcfg_wt_only),
          qbase_linear_reference(x, weight, qcfg_wt_only))

    # TODO(synk): QBase._forward_func is abstract in PyTorch; the Linear (x @ W^T)
    # instantiation is used here as the concrete hot path.
    print("KERNEL_OK")
</pallas_src>

<mosaic_0001>
module attributes {stable_mosaic.version = 11 : i64} {
  func.func @kernel(%arg0: i32, %arg1: i32, %arg2: memref<2xf32, #tpu.memory_space<smem>>, %arg3: memref<16x128xf32, #tpu.memory_space<vmem>>, %arg4: memref<16x128xbf16, #tpu.memory_space<vmem>>) attributes {dimension_semantics = [#tpu.dimension_semantics<parallel>, #tpu.dimension_semantics<parallel>], iteration_bounds = array<i64: 1, 1>, scalar_prefetch = 1 : i64, scratch_operands = 0 : i64, tpu.core_type = #tpu.core_type<tc>, window_params = [{transform_indices = @transform_0, window_bounds = array<i64: 16, 128>}, {transform_indices = @transform_1, window_bounds = array<i64: 16, 128>}]} {
    %c0 = arith.constant 0 : index
    %c0_0 = arith.constant 0 : index
    %0 = vector.load %arg3[%c0, %c0_0] : memref<16x128xf32, #tpu.memory_space<vmem>>, vector<16x128xf32>
    %c16_i32 = arith.constant 16 : i32
    %1 = arith.muli %arg0, %c16_i32 : i32
    %2 = tpu.iota {dimensions = array<i32: 0>} : vector<16x128xi32>
    %3 = vector.broadcast %1 : i32 to vector<16x128xi32>
    %4 = arith.addi %3, %2 : vector<16x128xi32>
    %c8_i32 = arith.constant 8 : i32
    %5 = vector.broadcast %c8_i32 : i32 to vector<16x128xi32>
    %6 = arith.cmpi slt, %4, %5 : vector<16x128xi32>
    %c128_i32 = arith.constant 128 : i32
    %7 = arith.muli %arg1, %c128_i32 : i32
    %8 = tpu.iota {dimensions = array<i32: 1>} : vector<16x128xi32>
    %9 = vector.broadcast %7 : i32 to vector<16x128xi32>
    %10 = arith.addi %9, %8 : vector<16x128xi32>
    %c32_i32 = arith.constant 32 : i32
    %11 = vector.broadcast %c32_i32 : i32 to vector<16x128xi32>
    %12 = arith.cmpi slt, %10, %11 : vector<16x128xi32>
    %13 = arith.andi %6, %12 : vector<16x128xi1>
    %cst = arith.constant 0.000000e+00 : f32
    %14 = vector.broadcast %cst : f32 to vector<16x128xf32>
    %15 = arith.select %13, %0, %14 : vector<16x128xi1>, vector<16x128xf32>
    %c0_1 = arith.constant 0 : index
    %16 = memref.load %arg2[%c0_1] : memref<2xf32, #tpu.memory_space<smem>>
    %17 = vector.broadcast %16 : f32 to vector<16x128xf32>
    %18 = arith.mulf %15, %17 : vector<16x128xf32>
    %cst_2 = arith.constant 0.000000e+00 : f32
    %cst_3 = arith.constant 2.550000e+02 : f32
    %19 = vector.broadcast %cst_2 : f32 to vector<16x128xf32>
    %20 = arith.maximumf %19, %18 : vector<16x128xf32>
    %21 = vector.broadcast %cst_3 : f32 to vector<16x128xf32>
    %22 = arith.minimumf %21, %20 : vector<16x128xf32>
    %23 = math.roundeven %22 : vector<16x128xf32>
    %24 = arith.truncf %23 : vector<16x128xf32> to vector<16x128xbf16>
    %c0_4 = arith.constant 0 : index
    %c0_5 = arith.constant 0 : index
    %25 = vector.load %arg4[%c0_4, %c0_5] : memref<16x128xbf16, #tpu.memory_space<vmem>>, vector<16x128xbf16>
    tpu.vector_store %arg4[%c0_4, %c0_5], %24 {strides = array<i32>} : memref<16x128xbf16, #tpu.memory_space<vmem>>, vector<16x128xbf16>,
    return
  }
  func.func @transform_0(%arg0: i32, %arg1: i32, %arg2: memref<2xf32, #tpu.memory_space<smem>>) -> (i32, i32) {
    %c0_i32 = arith.constant 0 : i32
    return %arg0, %arg1 : i32, i32
  }
  func.func @transform_1(%arg0: i32, %arg1: i32, %arg2: memref<2xf32, #tpu.memory_space<smem>>) -> (i32, i32) {
    %c0_i32 = arith.constant 0 : i32
    return %arg0, %arg1 : i32, i32
  }
}

</mosaic_0001>

<llo_original>
// kernel: tpu_custom_call.1
$region0: #{tpu_custom_call.1}
  #allocation0 [shape = 'u32[]', space=smem, size = 0x4, offset = 0x4, fixed_abs, tag = 'smem constant byte address 0x4 - core index']
  #allocation1 [shape = 'u32[72,128]{1,0:T(1,128)}', space=vmem, size = 0x9000, scoped, tag = 'internal scratch']
  #allocation2 [shape = 's32[1]{0}', space=sflag, size = 0x4, scoped, tag = 'scoped memory for tpu_custom_call.1']
  #allocation3 [shape = 'u8[512]{0}', space=smem, size = 0x200, scoped, tag = 'prefetched SMEM operand 0']
  %s0 = inlined_call_operand.hbm [shape: f32[2], index: 0, kind: input, shape index: {}]
  %s1 = inlined_call_operand.hbm [shape: f32[8,32], index: 1, kind: input, shape index: {}]
  %s2 = inlined_call_operand.hbm [shape: bf16[16,128], index: 2, kind: output, shape index: {}]
  %s3 = sld [smem:[#allocation0]]
  $region18: #{tpu_custom_call.1} parent=0
    _
  %s5 = ssub.s32 1, %s3
  %s6 = scalar_select 0, %s5, %s3
  %s8 = sshll.u32 %s0, 4
  %s9 = int_to_ptr.hbm [resolvable:$true] %s8
  %11 = dma.hbm_to_smem %s9, 16, [#allocation3], [#allocation2]
  %13 = dma.done [#allocation2], 16
  %14 = sfence
  $region1: #{tpu_custom_call.1} parent=0
    #allocation4 [shape = 'u8[8192]{0}', space=vmem, size = 0x2000, scoped, tag = 'input window, operand 1, single buffered']
    #allocation5 [shape = 's32[1]{0}', space=sflag, size = 0x4, scoped, tag = 'scoped memory for tpu_custom_call.1']
    #allocation6 [shape = 's32[1]{0}', space=sflag, size = 0x4, scoped, tag = 'scoped memory for tpu_custom_call.1']
    #allocation7 [shape = 'u8[4096]{0}', space=vmem, size = 0x1000, scoped, tag = 'output window, operand 0, single buffered']
    %15 = vsyncpa [#allocation5], 0
    %16 = vsyncpa [#allocation6], 0
    // Predicated region
    $region2: #{tpu_custom_call.1} parent=1 // pred_check
      _
    $region3: #{tpu_custom_call.1} parent=1 // pred_check_branch
      %18 = sbr.rel (0) target = $region5
    $region4: #{tpu_custom_call.1} parent=1 // pred_region
      %20 = vsyncadd [#allocation5], 128
      %s21 = sshll.u32 %s1, 4
      %s22 = int_to_ptr.hbm [resolvable:$true] %s21
      %s23 = sshll.u32 [#allocation4], 4
      %s24 = int_to_ptr.vmem [resolvable:$true] %s23
      %29 = dma.hbm_to_vmem [thread:$0]  %s22, 128, %s24, [#allocation5], 128, 128, 8
    $region5: #{tpu_custom_call.1} parent=1 // pred_fallthru
      _
    // Predicated region
    $region6: #{tpu_custom_call.1} parent=1 // pred_check
      _
    $region7: #{tpu_custom_call.1} parent=1 // pred_check_branch
      %31 = sbr.rel (0) target = $region9
    $region8: #{tpu_custom_call.1} parent=1 // pred_region
      %33 = dma.done [#allocation5], 256
    $region9: #{tpu_custom_call.1} parent=1 // pred_fallthru
      _
    %v34 = vld [vmem:[#allocation4] sm:$0xff]
    %v35 = vld [vmem:[#allocation4 + $0x8] sm:$0xff]
    %s36 = smul.u32 0, 16
    %v37 = vlaneseq
    %v38 = vshrl.u32 %v37, 7
    %v39 = vadd.s32 %v38, 8
    %v40 = vstv %s36
    %v41 = vadd.s32 %v40, %v38
    %v42 = vadd.s32 %v40, %v39
    %vm43 = vcmp.lt.s32.totalorder %v41, 8
    %vm44 = vcmp.lt.s32.totalorder %v42, 8
    %s45 = smul.u32 0, 128
    %v46 = vlaneseq
    %v47 = vand.u32 %v46, 127
    %v48 = vstv %s45
    %v49 = vadd.s32 %v48, %v47
    %vm50 = vcmp.lt.s32.totalorder %v49, 32
    %vm51 = vmand %vm43, %vm50
    %vm52 = vmand %vm44, %vm50
    %v53 = vsel %vm51, %v34, 0.0
    %v54 = vsel %vm52, %v35, 0.0
    %s55 = sld [smem:[#allocation3]]
    %v56 = vstv %s55
    %v57 = vmul.f32 %v53, %v56
    %v58 = vmul.f32 %v54, %v56
    %v59 = vmax.f32 %v57, 0.0
    %v60 = vmax.f32 %v58, 0.0
    %v61 = vmin.f32 %v59, 255.0
    %v62 = vmin.f32 %v60, 255.0
    %v63 = vround.ne.pseudo %v61
    %v64 = vround.ne.pseudo %v62
    %v65 = vpack.c.bf16 %v63, %v63
    %v66 = vpack.c.bf16 %v64, %v64
    %67 = vst [vmem:[#allocation7] sm:$0xf] %v65
    %68 = vst [vmem:[#allocation7 + $0x4] sm:$0xf] %v66
    // Predicated region
    $region10: #{tpu_custom_call.1} parent=1 // pred_check
      _
    $region11: #{tpu_custom_call.1} parent=1 // pred_check_branch
      %70 = sbr.rel (0) target = $region13
    $region12: #{tpu_custom_call.1} parent=1 // pred_region
      %72 = vsyncadd [#allocation6], 0
      %s73 = sshll.u32 [#allocation7], 4
      %s74 = int_to_ptr.vmem [resolvable:$true] %s73
      %s75 = sshll.u32 %s2, 4
      %s76 = int_to_ptr.hbm [resolvable:$true] %s75
      %81 = dma.vmem_to_hbm [thread:$0]  %s74, 128, %s76, [#allocation6], 64, 64, 4
    $region13: #{tpu_custom_call.1} parent=1 // pred_fallthru
      _
    // Predicated region
    $region14: #{tpu_custom_call.1} parent=1 // pred_check
      _
    $region15: #{tpu_custom_call.1} parent=1 // pred_check_branch
      %83 = sbr.rel (0) target = $region17
    $region16: #{tpu_custom_call.1} parent=1 // pred_region
      %85 = dma.done [#allocation6], 128
    $region17: #{tpu_custom_call.1} parent=1 // pred_fallthru
      _
    %86 = vsyncpa [#allocation5], 1
    %87 = vsyncpa [#allocation6], 1

</llo_original>
